<compile_context>
chip_gen: v6e
topology: v6e:2x2x1
jax: 0.10.0
libtpu: 0.0.40
codegen_flags: <defaults>
</compile_context>

<pallas_src>
import jax
import jax.numpy as jnp
from jax.experimental import pallas as pl
from jax.experimental.pallas import tpu as pltpu

LANE = 128
SUBLANE = 8


def _round_up(x, m):
    return (x + m - 1) // m * m


def _ensemble_critic_kernel(sa_ref, w1_ref, b1_ref, w2_ref, b2_ref,
                            w3_ref, b3_ref, w4_ref, b4_ref, out_ref):
    """One grid step = one ensemble member. All refs are VMEM blocks.

    sa_ref : [B, K_pad] f32   (shared, resident across the whole grid)
    w*_ref : per-member weights, bf16, member dim squeezed out
    b*_ref : per-member biases [1, H] / [1, OUT_PAD], f32
    out_ref: [B, OUT_PAD] f32  (lane-dense padded scalar head)
    """
    x = sa_ref[...].astype(jnp.bfloat16)

    h = jnp.dot(x, w1_ref[...], preferred_element_type=jnp.float32) + b1_ref[...]
    h = jnp.maximum(h, 0.0)

    h = jnp.dot(h.astype(jnp.bfloat16), w2_ref[...],
                preferred_element_type=jnp.float32) + b2_ref[...]
    h = jnp.maximum(h, 0.0)

    h = jnp.dot(h.astype(jnp.bfloat16), w3_ref[...],
                preferred_element_type=jnp.float32) + b3_ref[...]
    h = jnp.maximum(h, 0.0)

    q = jnp.dot(h.astype(jnp.bfloat16), w4_ref[...],
                preferred_element_type=jnp.float32) + b4_ref[...]
    out_ref[...] = q.astype(out_ref.dtype)


def init_critic_params(key, n_critics, in_dim, hidden):
    """PyTorch-Linear-style uniform(+-1/sqrt(fan_in)) init, stacked over E."""
    dims = [(in_dim, hidden), (hidden, hidden), (hidden, hidden), (hidden, 1)]
    keys = jax.random.split(key, 2 * len(dims))
    params = {}
    for i, (din, dout) in enumerate(dims, start=1):
        bound = 1.0 / float(din) ** 0.5
        params[f"w{i}"] = jax.random.uniform(
            keys[2 * (i - 1)], (n_critics, din, dout), jnp.float32,
            minval=-bound, maxval=bound)
        params[f"b{i}"] = jax.random.uniform(
            keys[2 * (i - 1) + 1], (n_critics, 1, dout), jnp.float32,
            minval=-bound, maxval=bound)
    return params


def prepare_params(params, max_action, sg_dim, action_dim):
    """One-time param prep: fold 1/max_action into w1's action rows, pad the
    first-layer K dim to 128, pad the scalar head to a 128-wide lane slab,
    and cast weights to bf16 (biases stay f32)."""
    E, in_dim, hidden = params["w1"].shape
    assert in_dim == sg_dim + action_dim
    k_pad = _round_up(in_dim, LANE)
    out_pad = LANE

    # Fold actions / max_action into the action rows of w1.
    scale = jnp.concatenate(
        [jnp.ones((sg_dim,), jnp.float32),
         jnp.full((action_dim,), 1.0 / float(max_action), jnp.float32)])
    w1 = params["w1"] * scale[None, :, None]
    w1 = jnp.pad(w1, ((0, 0), (0, k_pad - in_dim), (0, 0)))

    w4 = jnp.pad(params["w4"], ((0, 0), (0, 0), (0, out_pad - 1)))
    b4 = jnp.pad(params["b4"], ((0, 0), (0, 0), (0, out_pad - 1)))

    return {
        "w1": w1.astype(jnp.bfloat16), "b1": params["b1"],
        "w2": params["w2"].astype(jnp.bfloat16), "b2": params["b2"],
        "w3": params["w3"].astype(jnp.bfloat16), "b3": params["b3"],
        "w4": w4.astype(jnp.bfloat16), "b4": b4,
    }


def ensemble_critic_forward(x, actions, prep):
    """x: [B, obs+goal] f32, actions: [B, action_dim] f32 (raw, un-scaled).
    Returns q: [E, B, 1] f32 (matches torch.stack of per-member heads)."""
    sa = jnp.concatenate([x, actions], axis=1).astype(jnp.float32)
    batch, k = sa.shape
    E, k_pad, hidden = prep["w1"].shape
    out_pad = prep["w4"].shape[2]

    b_pad = _round_up(batch, SUBLANE)
    sa = jnp.pad(sa, ((0, b_pad - batch), (0, k_pad - k)))

    weight_names = ("w1", "b1", "w2", "b2", "w3", "b3", "w4", "b4")

    def member_spec(arr):
        nd = arr.ndim
        return pl.BlockSpec((None,) + arr.shape[1:],
                            lambda e, _nd=nd: (e,) + (0,) * (_nd - 1))

    flops = 2 * E * b_pad * (k_pad * hidden + 2 * hidden * hidden
                             + hidden * out_pad)
    bytes_accessed = int(
        sa.size * sa.dtype.itemsize
        + sum(prep[n].size * prep[n].dtype.itemsize for n in weight_names)
        + E * b_pad * out_pad * 4)

    out = pl.pallas_call(
        _ensemble_critic_kernel,
        out_shape=jax.ShapeDtypeStruct((E, b_pad, out_pad), jnp.float32),
        grid=(E,),
        in_specs=[pl.BlockSpec((b_pad, k_pad), lambda e: (0, 0))]
                 + [member_spec(prep[n]) for n in weight_names],
        out_specs=pl.BlockSpec((None, b_pad, out_pad), lambda e: (e, 0, 0)),
        compiler_params=pltpu.CompilerParams(
            dimension_semantics=("parallel",)),
        cost_estimate=pl.CostEstimate(
            flops=flops, transcendentals=0, bytes_accessed=bytes_accessed),
    )(sa, *[prep[n] for n in weight_names])

    return out[:, :batch, :1]


def ensemble_critic_reference_prepared(x, actions, prep, batch):
    """Bit-faithful pure-JAX reference using the same prepared (bf16) params."""
    sa = jnp.concatenate([x, actions], axis=1).astype(jnp.float32)
    k = sa.shape[1]
    k_pad = prep["w1"].shape[1]
    sa = jnp.pad(sa, ((0, 0), (0, k_pad - k))).astype(jnp.bfloat16)

    def one_member(w1, b1, w2, b2, w3, b3, w4, b4):
        h = jnp.maximum(jnp.dot(sa, w1, preferred_element_type=jnp.float32) + b1, 0.0)
        h = jnp.maximum(jnp.dot(h.astype(jnp.bfloat16), w2,
                                preferred_element_type=jnp.float32) + b2, 0.0)
        h = jnp.maximum(jnp.dot(h.astype(jnp.bfloat16), w3,
                                preferred_element_type=jnp.float32) + b3, 0.0)
        return jnp.dot(h.astype(jnp.bfloat16), w4,
                       preferred_element_type=jnp.float32) + b4

    q = jax.vmap(one_member)(prep["w1"], prep["b1"], prep["w2"], prep["b2"],
                             prep["w3"], prep["b3"], prep["w4"], prep["b4"])
    return q[:, :batch, :1]


def ensemble_critic_reference_f32(x, actions, params, max_action):
    """Full-f32 reference matching the PyTorch module semantics exactly."""
    sa = jnp.concatenate([x, actions / max_action], axis=1)

    def one_member(w1, b1, w2, b2, w3, b3, w4, b4):
        h = jax.nn.relu(sa @ w1 + b1)
        h = jax.nn.relu(h @ w2 + b2)
        h = jax.nn.relu(h @ w3 + b3)
        return h @ w4 + b4

    return jax.vmap(one_member)(params["w1"], params["b1"], params["w2"],
                                params["b2"], params["w3"], params["b3"],
                                params["w4"], params["b4"])


if __name__ == "__main__":
    # Small shapes consistent with the module: obs_dim=10, goal_dim=3,
    # action_dim=4, ensemble_hidden_size=256, n_internal_critics=3, batch=8.
    obs_dim, goal_dim, action_dim = 10, 3, 4
    hidden = 256
    n_critics = 3
    batch = 8
    max_action = 1.5

    sg_dim = obs_dim + goal_dim
    in_dim = sg_dim + action_dim

    key = jax.random.PRNGKey(0)
    k_params, k_x, k_a = jax.random.split(key, 3)

    params = init_critic_params(k_params, n_critics, in_dim, hidden)
    prep = prepare_params(params, max_action, sg_dim, action_dim)

    x = jax.random.normal(k_x, (batch, sg_dim), jnp.float32)
    actions = max_action * jax.random.uniform(
        k_a, (batch, action_dim), jnp.float32, minval=-1.0, maxval=1.0)

    q = ensemble_critic_forward(x, actions, prep)
    q = jax.block_until_ready(q)
    assert q.shape == (n_critics, batch, 1)

    # Exact-path check against a pure-JAX reference using the same bf16 params.
    ref_bf16 = ensemble_critic_reference_prepared(x, actions, prep, batch)
    assert jnp.allclose(q, ref_bf16, atol=1e-3, rtol=1e-3), \
        "mismatch vs bf16-prepared reference"

    # Semantic check (bias fold + scaling) against the full-f32 PyTorch-style
    # reference; tolerance accounts for bf16 weight quantization.
    ref_f32 = ensemble_critic_reference_f32(x, actions, params, max_action)
    assert jnp.allclose(q, ref_f32, atol=3e-2, rtol=3e-2), \
        "mismatch vs f32 reference"

    print("KERNEL_OK")
</pallas_src>

<mosaic_0001>
module attributes {stable_mosaic.version = 11 : i64} {
  func.func @_ensemble_critic_kernel(%arg0: i32, %arg1: memref<8x128xf32, #tpu.memory_space<vmem>>, %arg2: memref<1x128x256xbf16, #tpu.memory_space<vmem>>, %arg3: memref<1x1x256xf32, #tpu.memory_space<vmem>>, %arg4: memref<1x256x256xbf16, #tpu.memory_space<vmem>>, %arg5: memref<1x1x256xf32, #tpu.memory_space<vmem>>, %arg6: memref<1x256x256xbf16, #tpu.memory_space<vmem>>, %arg7: memref<1x1x256xf32, #tpu.memory_space<vmem>>, %arg8: memref<1x256x128xbf16, #tpu.memory_space<vmem>>, %arg9: memref<1x1x128xf32, #tpu.memory_space<vmem>>, %arg10: memref<1x8x128xf32, #tpu.memory_space<vmem>>) attributes {dimension_semantics = [#tpu.dimension_semantics<parallel>], iteration_bounds = array<i64: 3>, scalar_prefetch = 0 : i64, scratch_operands = 0 : i64, tpu.core_type = #tpu.core_type<tc>, window_params = [{pipeline_mode = #tpu.pipeline_mode<synchronous>, transform_indices = @transform_0, window_bounds = array<i64: 8, 128>}, {transform_indices = @transform_1, window_bounds = array<i64: 1, 128, 256>}, {transform_indices = @transform_2, window_bounds = array<i64: 1, 1, 256>}, {transform_indices = @transform_3, window_bounds = array<i64: 1, 256, 256>}, {transform_indices = @transform_4, window_bounds = array<i64: 1, 1, 256>}, {transform_indices = @transform_5, window_bounds = array<i64: 1, 256, 256>}, {transform_indices = @transform_6, window_bounds = array<i64: 1, 1, 256>}, {transform_indices = @transform_7, window_bounds = array<i64: 1, 256, 128>}, {transform_indices = @transform_8, window_bounds = array<i64: 1, 1, 128>}, {transform_indices = @transform_9, window_bounds = array<i64: 1, 8, 128>}]} {
    %c0 = arith.constant 0 : index
    %c0_0 = arith.constant 0 : index
    %0 = vector.load %arg1[%c0, %c0_0] : memref<8x128xf32, #tpu.memory_space<vmem>>, vector<8x128xf32>
    %1 = arith.truncf %0 : vector<8x128xf32> to vector<8x128xbf16>
    %c0_1 = arith.constant 0 : index
    %c0_2 = arith.constant 0 : index
    %c0_3 = arith.constant 0 : index
    %2 = vector.load %arg2[%c0_1, %c0_2, %c0_3] : memref<1x128x256xbf16, #tpu.memory_space<vmem>>, vector<1x128x256xbf16>
    %3 = vector.shape_cast %2 : vector<1x128x256xbf16> to vector<128x256xbf16>
    %cst = arith.constant dense<0.000000e+00> : vector<8x256xf32>
    %4 = tpu.matmul %1, %3, %cst {dimension_numbers = #tpu.dot_dimension_numbers<[1], [0], [0], [1], [0, 0, 1, 1], [], []>} : vector<8x128xbf16>, vector<128x256xbf16>, vector<8x256xf32> -> vector<8x256xf32>
    %c0_4 = arith.constant 0 : index
    %c0_5 = arith.constant 0 : index
    %c0_6 = arith.constant 0 : index
    %5 = vector.load %arg3[%c0_4, %c0_5, %c0_6] : memref<1x1x256xf32, #tpu.memory_space<vmem>>, vector<1x1x256xf32>
    %6 = vector.shape_cast %5 : vector<1x1x256xf32> to vector<1x256xf32>
    %7 = vector.broadcast %6 : vector<1x256xf32> to vector<8x256xf32>
    %8 = arith.addf %4, %7 : vector<8x256xf32>
    %cst_7 = arith.constant 0.000000e+00 : f32
    %9 = vector.broadcast %cst_7 : f32 to vector<8x256xf32>
    %10 = arith.maximumf %8, %9 : vector<8x256xf32>
    %11 = arith.truncf %10 : vector<8x256xf32> to vector<8x256xbf16>
    %c0_8 = arith.constant 0 : index
    %c0_9 = arith.constant 0 : index
    %c0_10 = arith.constant 0 : index
    %12 = vector.load %arg4[%c0_8, %c0_9, %c0_10] : memref<1x256x256xbf16, #tpu.memory_space<vmem>>, vector<1x256x256xbf16>
    %13 = vector.shape_cast %12 : vector<1x256x256xbf16> to vector<256x256xbf16>
    %cst_11 = arith.constant dense<0.000000e+00> : vector<8x256xf32>
    %14 = tpu.matmul %11, %13, %cst_11 {dimension_numbers = #tpu.dot_dimension_numbers<[1], [0], [0], [1], [0, 0, 1, 1], [], []>} : vector<8x256xbf16>, vector<256x256xbf16>, vector<8x256xf32> -> vector<8x256xf32>
    %c0_12 = arith.constant 0 : index
    %c0_13 = arith.constant 0 : index
    %c0_14 = arith.constant 0 : index
    %15 = vector.load %arg5[%c0_12, %c0_13, %c0_14] : memref<1x1x256xf32, #tpu.memory_space<vmem>>, vector<1x1x256xf32>
    %16 = vector.shape_cast %15 : vector<1x1x256xf32> to vector<1x256xf32>
    %17 = vector.broadcast %16 : vector<1x256xf32> to vector<8x256xf32>
    %18 = arith.addf %14, %17 : vector<8x256xf32>
    %cst_15 = arith.constant 0.000000e+00 : f32
    %19 = vector.broadcast %cst_15 : f32 to vector<8x256xf32>
    %20 = arith.maximumf %18, %19 : vector<8x256xf32>
    %21 = arith.truncf %20 : vector<8x256xf32> to vector<8x256xbf16>
    %c0_16 = arith.constant 0 : index
    %c0_17 = arith.constant 0 : index
    %c0_18 = arith.constant 0 : index
    %22 = vector.load %arg6[%c0_16, %c0_17, %c0_18] : memref<1x256x256xbf16, #tpu.memory_space<vmem>>, vector<1x256x256xbf16>
    %23 = vector.shape_cast %22 : vector<1x256x256xbf16> to vector<256x256xbf16>
    %cst_19 = arith.constant dense<0.000000e+00> : vector<8x256xf32>
    %24 = tpu.matmul %21, %23, %cst_19 {dimension_numbers = #tpu.dot_dimension_numbers<[1], [0], [0], [1], [0, 0, 1, 1], [], []>} : vector<8x256xbf16>, vector<256x256xbf16>, vector<8x256xf32> -> vector<8x256xf32>
    %c0_20 = arith.constant 0 : index
    %c0_21 = arith.constant 0 : index
    %c0_22 = arith.constant 0 : index
    %25 = vector.load %arg7[%c0_20, %c0_21, %c0_22] : memref<1x1x256xf32, #tpu.memory_space<vmem>>, vector<1x1x256xf32>
    %26 = vector.shape_cast %25 : vector<1x1x256xf32> to vector<1x256xf32>
    %27 = vector.broadcast %26 : vector<1x256xf32> to vector<8x256xf32>
    %28 = arith.addf %24, %27 : vector<8x256xf32>
    %cst_23 = arith.constant 0.000000e+00 : f32
    %29 = vector.broadcast %cst_23 : f32 to vector<8x256xf32>
    %30 = arith.maximumf %28, %29 : vector<8x256xf32>
    %31 = arith.truncf %30 : vector<8x256xf32> to vector<8x256xbf16>
    %c0_24 = arith.constant 0 : index
    %c0_25 = arith.constant 0 : index
    %c0_26 = arith.constant 0 : index
    %32 = vector.load %arg8[%c0_24, %c0_25, %c0_26] : memref<1x256x128xbf16, #tpu.memory_space<vmem>>, vector<1x256x128xbf16>
    %33 = vector.shape_cast %32 : vector<1x256x128xbf16> to vector<256x128xbf16>
    %cst_27 = arith.constant dense<0.000000e+00> : vector<8x128xf32>
    %34 = tpu.matmul %31, %33, %cst_27 {dimension_numbers = #tpu.dot_dimension_numbers<[1], [0], [0], [1], [0, 0, 1, 1], [], []>} : vector<8x256xbf16>, vector<256x128xbf16>, vector<8x128xf32> -> vector<8x128xf32>
    %c0_28 = arith.constant 0 : index
    %c0_29 = arith.constant 0 : index
    %c0_30 = arith.constant 0 : index
    %35 = vector.load %arg9[%c0_28, %c0_29, %c0_30] : memref<1x1x128xf32, #tpu.memory_space<vmem>>, vector<1x1x128xf32>
    %36 = vector.shape_cast %35 : vector<1x1x128xf32> to vector<1x128xf32>
    %37 = vector.broadcast %36 : vector<1x128xf32> to vector<8x128xf32>
    %38 = arith.addf %34, %37 : vector<8x128xf32>
    %c0_31 = arith.constant 0 : index
    %c0_32 = arith.constant 0 : index
    %c0_33 = arith.constant 0 : index
    %39 = vector.load %arg10[%c0_31, %c0_32, %c0_33] : memref<1x8x128xf32, #tpu.memory_space<vmem>>, vector<1x8x128xf32>
    %40 = vector.shape_cast %39 : vector<1x8x128xf32> to vector<8x128xf32>
    %41 = vector.shape_cast %38 : vector<8x128xf32> to vector<1x8x128xf32>
    tpu.vector_store %arg10[%c0_31, %c0_32, %c0_33], %41 {strides = array<i32>} : memref<1x8x128xf32, #tpu.memory_space<vmem>>, vector<1x8x128xf32>,
    return
  }
  func.func @transform_0(%arg0: i32) -> (i32, i32) {
    %c0_i32 = arith.constant 0 : i32
    %c0_i32_0 = arith.constant 0 : i32
    %c0_i32_1 = arith.constant 0 : i32
    return %c0_i32, %c0_i32_0 : i32, i32
  }
  func.func @transform_1(%arg0: i32) -> (i32, i32, i32) {
    %c0_i32 = arith.constant 0 : i32
    %c0_i32_0 = arith.constant 0 : i32
    %c0_i32_1 = arith.constant 0 : i32
    return %arg0, %c0_i32, %c0_i32_0 : i32, i32, i32
  }
  func.func @transform_2(%arg0: i32) -> (i32, i32, i32) {
    %c0_i32 = arith.constant 0 : i32
    %c0_i32_0 = arith.constant 0 : i32
    %c0_i32_1 = arith.constant 0 : i32
    return %arg0, %c0_i32, %c0_i32_0 : i32, i32, i32
  }
  func.func @transform_3(%arg0: i32) -> (i32, i32, i32) {
    %c0_i32 = arith.constant 0 : i32
    %c0_i32_0 = arith.constant 0 : i32
    %c0_i32_1 = arith.constant 0 : i32
    return %arg0, %c0_i32, %c0_i32_0 : i32, i32, i32
  }
  func.func @transform_4(%arg0: i32) -> (i32, i32, i32) {
    %c0_i32 = arith.constant 0 : i32
    %c0_i32_0 = arith.constant 0 : i32
    %c0_i32_1 = arith.constant 0 : i32
    return %arg0, %c0_i32, %c0_i32_0 : i32, i32, i32
  }
  func.func @transform_5(%arg0: i32) -> (i32, i32, i32) {
    %c0_i32 = arith.constant 0 : i32
    %c0_i32_0 = arith.constant 0 : i32
    %c0_i32_1 = arith.constant 0 : i32
    return %arg0, %c0_i32, %c0_i32_0 : i32, i32, i32
  }
  func.func @transform_6(%arg0: i32) -> (i32, i32, i32) {
    %c0_i32 = arith.constant 0 : i32
    %c0_i32_0 = arith.constant 0 : i32
    %c0_i32_1 = arith.constant 0 : i32
    return %arg0, %c0_i32, %c0_i32_0 : i32, i32, i32
  }
  func.func @transform_7(%arg0: i32) -> (i32, i32, i32) {
    %c0_i32 = arith.constant 0 : i32
    %c0_i32_0 = arith.constant 0 : i32
    %c0_i32_1 = arith.constant 0 : i32
    return %arg0, %c0_i32, %c0_i32_0 : i32, i32, i32
  }
  func.func @transform_8(%arg0: i32) -> (i32, i32, i32) {
    %c0_i32 = arith.constant 0 : i32
    %c0_i32_0 = arith.constant 0 : i32
    %c0_i32_1 = arith.constant 0 : i32
    return %arg0, %c0_i32, %c0_i32_0 : i32, i32, i32
  }
  func.func @transform_9(%arg0: i32) -> (i32, i32, i32) {
    %c0_i32 = arith.constant 0 : i32
    %c0_i32_0 = arith.constant 0 : i32
    %c0_i32_1 = arith.constant 0 : i32
    return %arg0, %c0_i32, %c0_i32_0 : i32, i32, i32
  }
}

</mosaic_0001>

<llo_original>
// kernel: tpu_custom_call.1
$region0: #{tpu_custom_call.1}
  #allocation0 [shape = 'u32[]', space=smem, size = 0x4, offset = 0x4, fixed_abs, tag = 'smem constant byte address 0x4 - core index']
  #allocation1 [shape = 'u32[144,128]{1,0:T(1,128)}', space=vmem, size = 0x12000, scoped, tag = 'internal scratch']
  %s0 = inlined_call_operand.hbm [shape: f32[8,128], index: 0, kind: input, shape index: {}]
  %s1 = inlined_call_operand.hbm [shape: bf16[3,128,256], index: 1, kind: input, shape index: {}]
  %s2 = inlined_call_operand.hbm [shape: f32[3,1,256], index: 2, kind: input, shape index: {}]
  %s3 = inlined_call_operand.hbm [shape: bf16[3,256,256], index: 3, kind: input, shape index: {}]
  %s4 = inlined_call_operand.vmem [shape: f32[3,1,256], index: 4, kind: input, shape index: {}]
  %s5 = inlined_call_operand.hbm [shape: bf16[3,256,256], index: 5, kind: input, shape index: {}]
  %s6 = inlined_call_operand.hbm [shape: f32[3,1,256], index: 6, kind: input, shape index: {}]
  %s7 = inlined_call_operand.hbm [shape: bf16[3,256,128], index: 7, kind: input, shape index: {}]
  %s8 = inlined_call_operand.vmem [shape: f32[3,1,128], index: 8, kind: input, shape index: {}]
  %s9 = inlined_call_operand.hbm [shape: f32[3,8,128], index: 9, kind: output, shape index: {}]
  %s10 = sld [smem:[#allocation0]]
  $region97: #{tpu_custom_call.1} parent=0
    _
  %s12 = ssub.s32 1, %s10
  %s13 = scalar_select 0, %s12, %s10
  $region1: #{tpu_custom_call.1} parent=0
    #allocation2 [shape = 'u8[4096]{0}', space=vmem, size = 0x1000, scoped, tag = 'input window, operand 0, single buffered']
    #allocation3 [shape = 's32[2]{0}', space=sflag, size = 0x8, scoped, tag = 'scoped memory for tpu_custom_call.1']
    #allocation4 [shape = 's32[2]{0}', space=sflag, size = 0x8, scoped, tag = 'scoped memory for tpu_custom_call.1']
    #allocation5 [shape = 'u8[131072]{0}', space=vmem, size = 0x20000, scoped, tag = 'input window, operand 1']
    #allocation6 [shape = 's32[2]{0}', space=sflag, size = 0x8, scoped, tag = 'scoped memory for tpu_custom_call.1']
    #allocation7 [shape = 'u8[2048]{0}', space=vmem, size = 0x800, scoped, tag = 'input window, operand 2']
    #allocation8 [shape = 'u8[262144]{0}', space=vmem, size = 0x40000, scoped, tag = 'input window, operand 3']
    #allocation9 [shape = 's32[2]{0}', space=sflag, size = 0x8, scoped, tag = 'scoped memory for tpu_custom_call.1']
    #allocation10 [shape = 'u8[262144]{0}', space=vmem, size = 0x40000, scoped, tag = 'input window, operand 5']
    #allocation11 [shape = 'u8[2048]{0}', space=vmem, size = 0x800, scoped, tag = 'input window, operand 6']
    #allocation12 [shape = 's32[2]{0}', space=sflag, size = 0x8, scoped, tag = 'scoped memory for tpu_custom_call.1']
    #allocation13 [shape = 'u8[131072]{0}', space=vmem, size = 0x20000, scoped, tag = 'input window, operand 7']
    #allocation14 [shape = 'u8[8192]{0}', space=vmem, size = 0x2000, scoped, tag = 'output window, operand 0']
    %14 = vsyncpa [#allocation3], 0
    %15 = vsyncpa [#allocation6], 0
    %s16 = scalar_lea.sflag [#allocation6], 1
    %17 = vsyncpa %s16, 0
    %18 = vsyncpa [#allocation9], 0
    %s19 = scalar_lea.sflag [#allocation9], 1
    %20 = vsyncpa %s19, 0
    %21 = vsyncpa [#allocation12], 0
    %s22 = scalar_lea.sflag [#allocation12], 1
    %23 = vsyncpa %s22, 0
    %24 = vsyncpa [#allocation4], 0
    %s25 = scalar_lea.sflag [#allocation4], 1
    %26 = vsyncpa %s25, 0
    loop: start=0, step=1, limit=5
    $region2: #{tpu_custom_call.1} parent=1 // loop_pre_header
      _
    $region3: #{tpu_custom_call.1} parent=1 // loop_header
      %s28 = sphi 0, %s32
      %p29 = scmp.ge.s32.totalorder %s28, 5
      %s36 = sphi 0, %s36
      %s38 = sphi 0, %s36
      %s39 = sphi 0, %s38
      %s53 = sphi 0, %s39
      %s59 = sphi 0, %s61
      %s62 = sphi 0, %s59
      %s63 = sphi 0, %s62
      %s79 = sphi 0, %s63
      %s85 = sphi 0, %s87
      %s88 = sphi 0, %s85
      %s89 = sphi 0, %s88
      %s105 = sphi 0, %s89
      %s111 = sphi 0, %s113
      %s114 = sphi 0, %s111
      %s115 = sphi 0, %s114
      %s131 = sphi 0, %s115
      %s137 = sphi 0, %s139
      %s140 = sphi 0, %s137
      %s141 = sphi 0, %s140
      %s157 = sphi 0, %s141
      %s163 = sphi 0, %s165
      %s166 = sphi 0, %s163
      %s167 = sphi 0, %s166
      %s183 = sphi 0, %s167
      %s189 = sphi 0, %s191
      %s192 = sphi 0, %s189
      %s193 = sphi 0, %s192
      %s209 = sphi 0, %s193
      %s215 = sphi 0, %s217
      %s218 = sphi 0, %s215
      %s219 = sphi 0, %s218
      %s235 = sphi 0, %s219
      %s241 = sphi 0, %s243
      %s244 = sphi 0, %s241
      %s245 = sphi 0, %s244
      %s261 = sphi 0, %s245
      %s267 = sphi 0, %s269
      %s270 = sphi 0, %s267
      %s271 = sphi 0, %s270
      %s287 = sphi 0, %s271
    $region4: #{tpu_custom_call.1} parent=1 // loop_header_branch
      %31 = sbr.rel (%p29) target = $region8
    $region5: #{tpu_custom_call.1} parent=1 // loop_body
      %s33 = ssub.s32 %s28, 1
      %s34 = ssub.s32 %s28, 2
      %s35 = sadd.s32 %s28, 1
      %s37 = sadd.s32 %s36, 1
      %p40 = scmp.eq.s32.totalorder %s28, 2
      %p41 = scmp.ne.s32.totalorder %s36, %s38
      %p42 = scmp.eq.s32.totalorder %s28, 0
      %p43 = por %p41, %p42
      %p44 = scmp.ne.s32.totalorder %s36, %s38
      %p45 = scmp.eq.s32.totalorder %s33, 2
      %p46 = por %p44, %p45
      %p47 = scmp.ne.s32.totalorder %s38, %s39
      %p48 = scmp.eq.s32.totalorder %s33, 0
      %p49 = por %p47, %p48
      %p50 = scmp.ne.s32.totalorder %s38, %s39
      %p51 = scmp.eq.s32.totalorder %s34, 2
      %p52 = por %p50, %p51
      %p54 = scmp.ne.s32.totalorder %s39, %s53
      %p55 = scmp.eq.s32.totalorder %s34, 0
      %p56 = por %p54, %p55
      %s57 = ssub.s32 %s28, %s35
      %p58 = scmp.eq.s32.totalorder %s57, 0
      %s60 = sadd.s32 %s59, 1
      %s61 = scalar_select %p58, %s59, %s60
      %p64 = pneg %p58
      %p65 = scmp.eq.s32.totalorder %s28, 2
      %p66 = por %p64, %p65
      %p67 = scmp.ne.s32.totalorder %s59, %s62
      %p68 = scmp.eq.s32.totalorder %s28, 0
      %p69 = por %p67, %p68
      %p70 = scmp.ne.s32.totalorder %s59, %s62
      %p71 = scmp.eq.s32.totalorder %s33, 2
      %p72 = por %p70, %p71
      %p73 = scmp.ne.s32.totalorder %s62, %s63
      %p74 = scmp.eq.s32.totalorder %s33, 0
      %p75 = por %p73, %p74
      %p76 = scmp.ne.s32.totalorder %s62, %s63
      %p77 = scmp.eq.s32.totalorder %s34, 2
      %p78 = por %p76, %p77
      %p80 = scmp.ne.s32.totalorder %s63, %s79
      %p81 = scmp.eq.s32.totalorder %s34, 0
      %p82 = por %p80, %p81
      %s83 = ssub.s32 %s28, %s35
      %p84 = scmp.eq.s32.totalorder %s83, 0
      %s86 = sadd.s32 %s85, 1
      %s87 = scalar_select %p84, %s85, %s86
      %p90 = pneg %p84
      %p91 = scmp.eq.s32.totalorder %s28, 2
      %p92 = por %p90, %p91
      %p93 = scmp.ne.s32.totalorder %s85, %s88
      %p94 = scmp.eq.s32.totalorder %s28, 0
      %p95 = por %p93, %p94
      %p96 = scmp.ne.s32.totalorder %s85, %s88
      %p97 = scmp.eq.s32.totalorder %s33, 2
      %p98 = por %p96, %p97
      %p99 = scmp.ne.s32.totalorder %s88, %s89
      %p100 = scmp.eq.s32.totalorder %s33, 0
      %p101 = por %p99, %p100
      %p102 = scmp.ne.s32.totalorder %s88, %s89
      %p103 = scmp.eq.s32.totalorder %s34, 2
      %p104 = por %p102, %p103
      %p106 = scmp.ne.s32.totalorder %s89, %s105
      %p107 = scmp.eq.s32.totalorder %s34, 0
      %p108 = por %p106, %p107
      %s109 = ssub.s32 %s28, %s35
      %p110 = scmp.eq.s32.totalorder %s109, 0
      %s112 = sadd.s32 %s111, 1
      %s113 = scalar_select %p110, %s111, %s112
      %p116 = pneg %p110
      %p117 = scmp.eq.s32.totalorder %s28, 2
      %p118 = por %p116, %p117
      %p119 = scmp.ne.s32.totalorder %s111, %s114
      %p120 = scmp.eq.s32.totalorder %s28, 0
      %p121 = por %p119, %p120
      %p122 = scmp.ne.s32.totalorder %s111, %s114
      %p123 = scmp.eq.s32.totalorder %s33, 2
      %p124 = por %p122, %p123
      %p125 = scmp.ne.s32.totalorder %s114, %s115
      %p126 = scmp.eq.s32.totalorder %s33, 0
      %p127 = por %p125, %p126
      %p128 = scmp.ne.s32.totalorder %s114, %s115
      %p129 = scmp.eq.s32.totalorder %s34, 2
      %p130 = por %p128, %p129
      %p132 = scmp.ne.s32.totalorder %s115, %s131
      %p133 = scmp.eq.s32.totalorder %s34, 0
      %p134 = por %p132, %p133
      %s135 = ssub.s32 %s28, %s35
      %p136 = scmp.eq.s32.totalorder %s135, 0
      %s138 = sadd.s32 %s137, 1
      %s139 = scalar_select %p136, %s137, %s138
      %p142 = pneg %p136
      %p143 = scmp.eq.s32.totalorder %s28, 2
      %p144 = por %p142, %p143
      %p145 = scmp.ne.s32.totalorder %s137, %s140
      %p146 = scmp.eq.s32.totalorder %s28, 0
      %p147 = por %p145, %p146
      %p148 = scmp.ne.s32.totalorder %s137, %s140
      %p149 = scmp.eq.s32.totalorder %s33, 2
      %p150 = por %p148, %p149
      %p151 = scmp.ne.s32.totalorder %s140, %s141
      %p152 = scmp.eq.s32.totalorder %s33, 0
      %p153 = por %p151, %p152
      %p154 = scmp.ne.s32.totalorder %s140, %s141
      %p155 = scmp.eq.s32.totalorder %s34, 2
      %p156 = por %p154, %p155
      %p158 = scmp.ne.s32.totalorder %s141, %s157
      %p159 = scmp.eq.s32.totalorder %s34, 0
      %p160 = por %p158, %p159
      %s161 = ssub.s32 %s28, %s35
      %p162 = scmp.eq.s32.totalorder %s161, 0
      %s164 = sadd.s32 %s163, 1
      %s165 = scalar_select %p162, %s163, %s164
      %p168 = pneg %p162
      %p169 = scmp.eq.s32.totalorder %s28, 2
      %p170 = por %p168, %p169
      %p171 = scmp.ne.s32.totalorder %s163, %s166
      %p172 = scmp.eq.s32.totalorder %s28, 0
      %p173 = por %p171, %p172
      %p174 = scmp.ne.s32.totalorder %s163, %s166
      %p175 = scmp.eq.s32.totalorder %s33, 2
      %p176 = por %p174, %p175
      %p177 = scmp.ne.s32.totalorder %s166, %s167
      %p178 = scmp.eq.s32.totalorder %s33, 0
      %p179 = por %p177, %p178
      %p180 = scmp.ne.s32.totalorder %s166, %s167
      %p181 = scmp.eq.s32.totalorder %s34, 2
      %p182 = por %p180, %p181
      %p184 = scmp.ne.s32.totalorder %s167, %s183
      %p185 = scmp.eq.s32.totalorder %s34, 0
      %p186 = por %p184, %p185
      %s187 = ssub.s32 %s28, %s35
      %p188 = scmp.eq.s32.totalorder %s187, 0
      %s190 = sadd.s32 %s189, 1
      %s191 = scalar_select %p188, %s189, %s190
      %p194 = pneg %p188
      %p195 = scmp.eq.s32.totalorder %s28, 2
      %p196 = por %p194, %p195
      %p197 = scmp.ne.s32.totalorder %s189, %s192
      %p198 = scmp.eq.s32.totalorder %s28, 0
      %p199 = por %p197, %p198
      %p200 = scmp.ne.s32.totalorder %s189, %s192
      %p201 = scmp.eq.s32.totalorder %s33, 2
      %p202 = por %p200, %p201
      %p203 = scmp.ne.s32.totalorder %s192, %s193
      %p204 = scmp.eq.s32.totalorder %s33, 0
      %p205 = por %p203, %p204
      %p206 = scmp.ne.s32.totalorder %s192, %s193
      %p207 = scmp.eq.s32.totalorder %s34, 2
      %p208 = por %p206, %p207
      %p210 = scmp.ne.s32.totalorder %s193, %s209
      %p211 = scmp.eq.s32.totalorder %s34, 0
      %p212 = por %p210, %p211
      %s213 = ssub.s32 %s28, %s35
      %p214 = scmp.eq.s32.totalorder %s213, 0
      %s216 = sadd.s32 %s215, 1
      %s217 = scalar_select %p214, %s215, %s216
      %p220 = pneg %p214
      %p221 = scmp.eq.s32.totalorder %s28, 2
      %p222 = por %p220, %p221
      %p223 = scmp.ne.s32.totalorder %s215, %s218
      %p224 = scmp.eq.s32.totalorder %s28, 0
      %p225 = por %p223, %p224
      %p226 = scmp.ne.s32.totalorder %s215, %s218
      %p227 = scmp.eq.s32.totalorder %s33, 2
      %p228 = por %p226, %p227
      %p229 = scmp.ne.s32.totalorder %s218, %s219
      %p230 = scmp.eq.s32.totalorder %s33, 0
      %p231 = por %p229, %p230
      %p232 = scmp.ne.s32.totalorder %s218, %s219
      %p233 = scmp.eq.s32.totalorder %s34, 2
      %p234 = por %p232, %p233
      %p236 = scmp.ne.s32.totalorder %s219, %s235
      %p237 = scmp.eq.s32.totalorder %s34, 0
      %p238 = por %p236, %p237
      %s239 = ssub.s32 %s28, %s35
      %p240 = scmp.eq.s32.totalorder %s239, 0
      %s242 = sadd.s32 %s241, 1
      %s243 = scalar_select %p240, %s241, %s242
      %p246 = pneg %p240
      %p247 = scmp.eq.s32.totalorder %s28, 2
      %p248 = por %p246, %p247
      %p249 = scmp.ne.s32.totalorder %s241, %s244
      %p250 = scmp.eq.s32.totalorder %s28, 0
      %p251 = por %p249, %p250
      %p252 = scmp.ne.s32.totalorder %s241, %s244
      %p253 = scmp.eq.s32.totalorder %s33, 2
      %p254 = por %p252, %p253
      %p255 = scmp.ne.s32.totalorder %s244, %s245
      %p256 = scmp.eq.s32.totalorder %s33, 0
      %p257 = por %p255, %p256
      %p258 = scmp.ne.s32.totalorder %s244, %s245
      %p259 = scmp.eq.s32.totalorder %s34, 2
      %p260 = por %p258, %p259
      %p262 = scmp.ne.s32.totalorder %s245, %s261
      %p263 = scmp.eq.s32.totalorder %s34, 0
      %p264 = por %p262, %p263
      %s265 = ssub.s32 %s28, %s35
      %p266 = scmp.eq.s32.totalorder %s265, 0
      %s268 = sadd.s32 %s267, 1
      %s269 = scalar_select %p266, %s267, %s268
      %p272 = pneg %p266
      %p273 = scmp.eq.s32.totalorder %s28, 2
      %p274 = por %p272, %p273
      %p275 = scmp.ne.s32.totalorder %s267, %s270
      %p276 = scmp.eq.s32.totalorder %s28, 0
      %p277 = por %p275, %p276
      %p278 = scmp.ne.s32.totalorder %s267, %s270
      %p279 = scmp.eq.s32.totalorder %s33, 2
      %p280 = por %p278, %p279
      %p281 = scmp.ne.s32.totalorder %s270, %s271
      %p282 = scmp.eq.s32.totalorder %s33, 0
      %p283 = por %p281, %p282
      %p284 = scmp.ne.s32.totalorder %s270, %s271
      %p285 = scmp.eq.s32.totalorder %s34, 2
      %p286 = por %p284, %p285
      %p288 = scmp.ne.s32.totalorder %s271, %s287
      %p289 = scmp.eq.s32.totalorder %s34, 0
      %p290 = por %p288, %p289
      %p291 = scmp.le.s32.totalorder 1, %s28
      %p292 = scmp.lt.s32.totalorder %s28, 4
      %p293 = pnand %p291, %p292
      %p294 = pneg %p293
      // Predicated region
      $region9: #{tpu_custom_call.1} parent=5 // pred_check
        _
      $region10: #{tpu_custom_call.1} parent=5 // pred_check_branch
        %296 = sbr.rel (%p293) target = $region12
      $region11: #{tpu_custom_call.1} parent=5 // pred_region
        %s297 = ssub.s32 %s28, 1
        // Predicated region
        $region13: #{tpu_custom_call.1} parent=11 // pred_check
          %p298 = pneg %p49
        $region14: #{tpu_custom_call.1} parent=11 // pred_check_branch
          %300 = sbr.rel (%p298) target = $region16
        $region15: #{tpu_custom_call.1} parent=11 // pred_region
          %s302 = ssub.s32 128, 128
          %303 = vsyncadd [#allocation3], %s302
          %s305 = sshll.u32 [#allocation2], 4
          %s306 = int_to_ptr.vmem [resolvable:$true] %s305
          %308 = dma.hbm_to_vmem [thread:$0]  %s0, 128, %s306, [#allocation3]
        $region16: #{tpu_custom_call.1} parent=11 // pred_fallthru
          _
      $region12: #{tpu_custom_call.1} parent=5 // pred_fallthru
        _
      %p309 = scmp.lt.s32.totalorder %s28, 3
      // Predicated region
      $region17: #{tpu_custom_call.1} parent=5 // pred_check
        %p310 = pneg %p309
      $region18: #{tpu_custom_call.1} parent=5 // pred_check_branch
        %312 = sbr.rel (%p310) target = $region20
      $region19: #{tpu_custom_call.1} parent=5 // pred_region
        // Predicated region
        $region21: #{tpu_custom_call.1} parent=19 // pred_check
          %p313 = pneg %p69
        $region22: #{tpu_custom_call.1} parent=19 // pred_check_branch
          %315 = sbr.rel (%p313) target = $region24
        $region23: #{tpu_custom_call.1} parent=19 // pred_region
          %s316 = sand.u32 %s28, 1
          %s317 = scalar_lea.sflag [#allocation6], %s316
          %s318 = sand.u32 %s59, 1
          %s319 = smul.addr %s318, 128
          %s320 = scalar_lea.vmem [#allocation5], %s319
          %s322 = ssub.s32 2048, 2048
          %323 = vsyncadd %s317, %s322
          %s324 = smul.addr %s28, 32
          %s325 = smul.addr %s324, 64
          %s326 = scalar_lea.hbm %s1, %s325
          %s327 = sshll.u32 %s320, 4
          %s328 = int_to_ptr.vmem [resolvable:$true] %s327
          %333 = dma.hbm_to_vmem [thread:$0]  %s326, 2048, %s328, %s317, 128, 128, 8
        $region24: #{tpu_custom_call.1} parent=19 // pred_fallthru
          _
        // Predicated region
        $region25: #{tpu_custom_call.1} parent=19 // pred_check
          %p334 = pneg %p95
        $region26: #{tpu_custom_call.1} parent=19 // pred_check_branch
          %336 = sbr.rel (%p334) target = $region28
        $region27: #{tpu_custom_call.1} parent=19 // pred_region
          %s337 = sand.u32 %s28, 1
          %s338 = scalar_lea.sflag [#allocation6], %s337
          %s339 = sand.u32 %s85, 1
          %s340 = smul.addr %s339, 2
          %s341 = scalar_lea.vmem [#allocation7], %s340
          %s343 = ssub.s32 32, 32
          %344 = vsyncadd %s338, %s343
          %s345 = smul.addr %s28, 2
          %s346 = smul.addr %s345, 16
          %s347 = scalar_lea.hbm %s2, %s346
          %s349 = sshll.u32 %s341, 4
          %s350 = int_to_ptr.vmem [resolvable:$true] %s349
          %352 = dma.hbm_to_vmem [thread:$0]  %s347, 32, %s350, %s338
        $region28: #{tpu_custom_call.1} parent=19 // pred_fallthru
          _
        // Predicated region
        $region29: #{tpu_custom_call.1} parent=19 // pred_check
          %p353 = pneg %p121
        $region30: #{tpu_custom_call.1} parent=19 // pred_check_branch
          %355 = sbr.rel (%p353) target = $region32
        $region31: #{tpu_custom_call.1} parent=19 // pred_region
          %s356 = sand.u32 %s28, 1
          %s357 = scalar_lea.sflag [#allocation9], %s356
          %s358 = sand.u32 %s111, 1
          %s359 = smul.addr %s358, 256
          %s360 = scalar_lea.vmem [#allocation8], %s359
          %s362 = ssub.s32 4096, 4096
          %363 = vsyncadd %s357, %s362
          %s364 = smul.addr %s28, 64
          %s365 = smul.addr %s364, 64
          %s366 = scalar_lea.hbm %s3, %s365
          %s367 = sshll.u32 %s360, 4
          %s368 = int_to_ptr.vmem [resolvable:$true] %s367
          %373 = dma.hbm_to_vmem [thread:$0]  %s366, 4096, %s368, %s357, 128, 128, 8
        $region32: #{tpu_custom_call.1} parent=19 // pred_fallthru
          _
        // Predicated region
        $region33: #{tpu_custom_call.1} parent=19 // pred_check
          %p374 = pneg %p147
        $region34: #{tpu_custom_call.1} parent=19 // pred_check_branch
          %376 = sbr.rel (%p374) target = $region36
        $region35: #{tpu_custom_call.1} parent=19 // pred_region
          %p377 = scmp.lt.s32.totalorder %s28, 2
          %s378 = scalar_select %p377, %s28, 2
          %s379 = smul.addr %s378, 2
          %s380 = scalar_lea.vmem %s4, %s379
        $region36: #{tpu_custom_call.1} parent=19 // pred_fallthru
          _
        // Predicated region
        $region37: #{tpu_custom_call.1} parent=19 // pred_check
          %p381 = pneg %p173
        $region38: #{tpu_custom_call.1} parent=19 // pred_check_branch
          %383 = sbr.rel (%p381) target = $region40
        $region39: #{tpu_custom_call.1} parent=19 // pred_region
          %s384 = sand.u32 %s28, 1
          %s385 = scalar_lea.sflag [#allocation9], %s384
          %s386 = sand.u32 %s163, 1
          %s387 = smul.addr %s386, 256
          %s388 = scalar_lea.vmem [#allocation10], %s387
          %s390 = ssub.s32 4096, 4096
          %391 = vsyncadd %s385, %s390
          %s392 = smul.addr %s28, 64
          %s393 = smul.addr %s392, 64
          %s394 = scalar_lea.hbm %s5, %s393
          %s395 = sshll.u32 %s388, 4
          %s396 = int_to_ptr.vmem [resolvable:$true] %s395
          %401 = dma.hbm_to_vmem [thread:$0]  %s394, 4096, %s396, %s385, 128, 128, 8
        $region40: #{tpu_custom_call.1} parent=19 // pred_fallthru
          _
        // Predicated region
        $region41: #{tpu_custom_call.1} parent=19 // pred_check
          %p402 = pneg %p199
        $region42: #{tpu_custom_call.1} parent=19 // pred_check_branch
          %404 = sbr.rel (%p402) target = $region44
        $region43: #{tpu_custom_call.1} parent=19 // pred_region
          %s405 = sand.u32 %s28, 1
          %s406 = scalar_lea.sflag [#allocation12], %s405
          %s407 = sand.u32 %s189, 1
          %s408 = smul.addr %s407, 2
          %s409 = scalar_lea.vmem [#allocation11], %s408
          %s411 = ssub.s32 32, 32
          %412 = vsyncadd %s406, %s411
          %s413 = smul.addr %s28, 2
          %s414 = smul.addr %s413, 16
          %s415 = scalar_lea.hbm %s6, %s414
          %s417 = sshll.u32 %s409, 4
          %s418 = int_to_ptr.vmem [resolvable:$true] %s417
          %420 = dma.hbm_to_vmem [thread:$0]  %s415, 32, %s418, %s406
        $region44: #{tpu_custom_call.1} parent=19 // pred_fallthru
          _
        // Predicated region
        $region45: #{tpu_custom_call.1} parent=19 // pred_check
          %p421 = pneg %p225
        $region46: #{tpu_custom_call.1} parent=19 // pred_check_branch
          %423 = sbr.rel (%p421) target = $region48
        $region47: #{tpu_custom_call.1} parent=19 // pred_region
          %s424 = sand.u32 %s28, 1
          %s425 = scalar_lea.sflag [#allocation12], %s424
          %s426 = sand.u32 %s215, 1
          %s427 = smul.addr %s426, 128
          %s428 = scalar_lea.vmem [#allocation13], %s427
          %s430 = ssub.s32 2048, 2048
          %431 = vsyncadd %s425, %s430
          %s432 = smul.addr %s28, 32
          %s433 = smul.addr %s432, 64
          %s434 = scalar_lea.hbm %s7, %s433
          %s435 = sshll.u32 %s428, 4
          %s436 = int_to_ptr.vmem [resolvable:$true] %s435
          %441 = dma.hbm_to_vmem [thread:$0]  %s434, 2048, %s436, %s425, 64, 64, 4
        $region48: #{tpu_custom_call.1} parent=19 // pred_fallthru
          _
        // Predicated region
        $region49: #{tpu_custom_call.1} parent=19 // pred_check
          %p442 = pneg %p251
        $region50: #{tpu_custom_call.1} parent=19 // pred_check_branch
          %444 = sbr.rel (%p442) target = $region52
        $region51: #{tpu_custom_call.1} parent=19 // pred_region
          %p445 = scmp.lt.s32.totalorder %s28, 2
          %s446 = scalar_select %p445, %s28, 2
          %s447 = scalar_lea.vmem %s8, %s446
        $region52: #{tpu_custom_call.1} parent=19 // pred_fallthru
          _
      $region20: #{tpu_custom_call.1} parent=5 // pred_fallthru
        _
      %p448 = scmp.le.s32.totalorder 1, %s28
      %p449 = scmp.lt.s32.totalorder %s28, 4
      %p450 = pnand %p448, %p449
      %p451 = pneg %p450
      // Predicated region
      $region53: #{tpu_custom_call.1} parent=5 // pred_check
        _
      $region54: #{tpu_custom_call.1} parent=5 // pred_check_branch
        %453 = sbr.rel (%p450) target = $region56
      $region55: #{tpu_custom_call.1} parent=5 // pred_region
        %s454 = ssub.s32 %s28, 1
        // Predicated region
        $region57: #{tpu_custom_call.1} parent=55 // pred_check
          %p455 = pneg %p49
        $region58: #{tpu_custom_call.1} parent=55 // pred_check_branch
          %457 = sbr.rel (%p455) target = $region60
        $region59: #{tpu_custom_call.1} parent=55 // pred_region
          %458 = dma.done [#allocation3], 128
        $region60: #{tpu_custom_call.1} parent=55 // pred_fallthru
          _
        %s459 = sand.u32 %s33, 1
        %s460 = scalar_lea.sflag [#allocation6], %s459
        %s461 = sand.u32 %s62, 1
        %s462 = smul.addr %s461, 128
        %s463 = scalar_lea.vmem [#allocation5], %s462
        // Predicated region
        $region61: #{tpu_custom_call.1} parent=55 // pred_check
          %p464 = pneg %p75
        $region62: #{tpu_custom_call.1} parent=55 // pred_check_branch
          %466 = sbr.rel (%p464) target = $region64
        $region63: #{tpu_custom_call.1} parent=55 // pred_region
          %467 = dma.done %s460, 2048
        $region64: #{tpu_custom_call.1} parent=55 // pred_fallthru
          _
        %s468 = sand.u32 %s33, 1
        %s469 = scalar_lea.sflag [#allocation6], %s468
        %s470 = sand.u32 %s88, 1
        %s471 = smul.addr %s470, 2
        %s472 = scalar_lea.vmem [#allocation7], %s471
        // Predicated region
        $region65: #{tpu_custom_call.1} parent=55 // pred_check
          %p473 = pneg %p101
        $region66: #{tpu_custom_call.1} parent=55 // pred_check_branch
          %475 = sbr.rel (%p473) target = $region68
        $region67: #{tpu_custom_call.1} parent=55 // pred_region
          %476 = dma.done %s469, 32
        $region68: #{tpu_custom_call.1} parent=55 // pred_fallthru
          _
        %s477 = sand.u32 %s33, 1
        %s478 = scalar_lea.sflag [#allocation9], %s477
        %s479 = sand.u32 %s114, 1
        %s480 = smul.addr %s479, 256
        %s481 = scalar_lea.vmem [#allocation8], %s480
        // Predicated region
        $region69: #{tpu_custom_call.1} parent=55 // pred_check
          %p482 = pneg %p127
        $region70: #{tpu_custom_call.1} parent=55 // pred_check_branch
          %484 = sbr.rel (%p482) target = $region72
        $region71: #{tpu_custom_call.1} parent=55 // pred_region
          %485 = dma.done %s478, 4096
        $region72: #{tpu_custom_call.1} parent=55 // pred_fallthru
          _
        %s486 = sand.u32 %s33, 1
        %s487 = scalar_lea.sflag [#allocation9], %s486
        %s488 = sand.u32 %s166, 1
        %s489 = smul.addr %s488, 256
        %s490 = scalar_lea.vmem [#allocation10], %s489
        // Predicated region
        $region73: #{tpu_custom_call.1} parent=55 // pred_check
          %p491 = pneg %p179
        $region74: #{tpu_custom_call.1} parent=55 // pred_check_branch
          %493 = sbr.rel (%p491) target = $region76
        $region75: #{tpu_custom_call.1} parent=55 // pred_region
          %494 = dma.done %s487, 4096
        $region76: #{tpu_custom_call.1} parent=55 // pred_fallthru
          _
        %s495 = sand.u32 %s33, 1
        %s496 = scalar_lea.sflag [#allocation12], %s495
        %s497 = sand.u32 %s192, 1
        %s498 = smul.addr %s497, 2
        %s499 = scalar_lea.vmem [#allocation11], %s498
        // Predicated region
        $region77: #{tpu_custom_call.1} parent=55 // pred_check
          %p500 = pneg %p205
        $region78: #{tpu_custom_call.1} parent=55 // pred_check_branch
          %502 = sbr.rel (%p500) target = $region80
        $region79: #{tpu_custom_call.1} parent=55 // pred_region
          %503 = dma.done %s496, 32
        $region80: #{tpu_custom_call.1} parent=55 // pred_fallthru
          _
        %s504 = sand.u32 %s33, 1
        %s505 = scalar_lea.sflag [#allocation12], %s504
        %s506 = sand.u32 %s218, 1
        %s507 = smul.addr %s506, 128
        %s508 = scalar_lea.vmem [#allocation13], %s507
        // Predicated region
        $region81: #{tpu_custom_call.1} parent=55 // pred_check
          %p509 = pneg %p231
        $region82: #{tpu_custom_call.1} parent=55 // pred_check_branch
          %511 = sbr.rel (%p509) target = $region84
        $region83: #{tpu_custom_call.1} parent=55 // pred_region
          %512 = dma.done %s505, 2048
        $region84: #{tpu_custom_call.1} parent=55 // pred_fallthru
          _
        %p513 = pneg %p49
        %p514 = pneg %p46
        %s515 = sand.u32 %s33, 1
        %s516 = scalar_lea.sflag [#allocation6], %s515
        %s517 = sand.u32 %s62, 1
        %s518 = smul.addr %s517, 128
        %s519 = scalar_lea.vmem [#allocation5], %s518
        %p520 = pneg %p75
        %p521 = pneg %p72
        %s522 = sand.u32 %s33, 1
        %s523 = scalar_lea.sflag [#allocation6], %s522
        %s524 = sand.u32 %s88, 1
        %s525 = smul.addr %s524, 2
        %s526 = scalar_lea.vmem [#allocation7], %s525
        %p527 = pneg %p101
        %p528 = pneg %p98
        %s529 = sand.u32 %s33, 1
        %s530 = scalar_lea.sflag [#allocation9], %s529
        %s531 = sand.u32 %s114, 1
        %s532 = smul.addr %s531, 256
        %s533 = scalar_lea.vmem [#allocation8], %s532
        %p534 = pneg %p127
        %p535 = pneg %p124
        %p536 = scmp.lt.s32.totalorder %s33, 2
        %s537 = scalar_select %p536, %s33, 2
        %s538 = smul.addr %s537, 2
        %s539 = scalar_lea.vmem %s4, %s538
        %p540 = pneg %p153
        %p541 = pneg %p150
        %s542 = sand.u32 %s33, 1
        %s543 = scalar_lea.sflag [#allocation9], %s542
        %s544 = sand.u32 %s166, 1
        %s545 = smul.addr %s544, 256
        %s546 = scalar_lea.vmem [#allocation10], %s545
        %p547 = pneg %p179
        %p548 = pneg %p176
        %s549 = sand.u32 %s33, 1
        %s550 = scalar_lea.sflag [#allocation12], %s549
        %s551 = sand.u32 %s192, 1
        %s552 = smul.addr %s551, 2
        %s553 = scalar_lea.vmem [#allocation11], %s552
        %p554 = pneg %p205
        %p555 = pneg %p202
        %s556 = sand.u32 %s33, 1
        %s557 = scalar_lea.sflag [#allocation12], %s556
        %s558 = sand.u32 %s218, 1
        %s559 = smul.addr %s558, 128
        %s560 = scalar_lea.vmem [#allocation13], %s559
        %p561 = pneg %p231
        %p562 = pneg %p228
        %p563 = scmp.lt.s32.totalorder %s33, 2
        %s564 = scalar_select %p563, %s33, 2
        %s565 = scalar_lea.vmem %s8, %s564
        %p566 = pneg %p257
        %p567 = pneg %p254
        %p568 = pneg %p283
        %p569 = pneg %p280
        %s570 = sand.u32 %s270, 1
        %s571 = scalar_lea.sflag [#allocation4], %s570
        %s572 = sand.u32 %s270, 1
        %s573 = smul.addr %s572, 8
        %s574 = scalar_lea.vmem [#allocation14], %s573
        %p575 = scmp.lt.s32.totalorder %s33, 2
        %s576 = scalar_select %p575, %s33, 2
        %s577 = smul.addr %s576, 2
        %s578 = scalar_lea.vmem %s4, %s577
        %p579 = scmp.lt.s32.totalorder %s33, 2
        %s580 = scalar_select %p579, %s33, 2
        %s581 = scalar_lea.vmem %s8, %s580
        %v583 = vld [vmem:[#allocation2] sm:$0xff]
        %v584 = vpack.c.bf16 %v583, %v583
        %v585 = vld [vmem:[%s463] sm:$0xff]
        %v586 = vld [vmem:[%s463 + $0x8] sm:$0xff]
        %v587 = vld [vmem:[%s463 + $0x10] sm:$0xff]
        %v588 = vld [vmem:[%s463 + $0x18] sm:$0xff]
        %v589 = vld [vmem:[%s463 + $0x20] sm:$0xff]
        %v590 = vld [vmem:[%s463 + $0x28] sm:$0xff]
        %v591 = vld [vmem:[%s463 + $0x30] sm:$0xff]
        %v592 = vld [vmem:[%s463 + $0x38] sm:$0xff]
        %v593 = vld [vmem:[%s463 + $0x40] sm:$0xff]
        %v594 = vld [vmem:[%s463 + $0x48] sm:$0xff]
        %v595 = vld [vmem:[%s463 + $0x50] sm:$0xff]
        %v596 = vld [vmem:[%s463 + $0x58] sm:$0xff]
        %v597 = vld [vmem:[%s463 + $0x60] sm:$0xff]
        %v598 = vld [vmem:[%s463 + $0x68] sm:$0xff]
        %v599 = vld [vmem:[%s463 + $0x70] sm:$0xff]
        %v600 = vld [vmem:[%s463 + $0x78] sm:$0xff]
        %v601 = vld [vmem:[%s472] sm:$0x3]
        %v603 = vlaneseq
        %v604 = vshrl.u32 %v603, 7
        %v605 = vsub.s32 0, %v604
        %v606 = vrot.slane %v601, %v605
        %v607 = vlaneseq
        %v608 = vshrl.u32 %v607, 7
        %v609 = vsub.s32 1, %v608
        %v610 = vrot.slane %v601, %v609
        %v629 = vunpack.c.l.b16 %v585
        %v630 = vunpack.c.h.b16 %v585
        %v631 = vunpack.c.l.b16 %v586
        %v632 = vunpack.c.h.b16 %v586
        %v633 = vunpack.c.l.b16 %v587
        %v634 = vunpack.c.h.b16 %v587
        %v635 = vunpack.c.l.b16 %v588
        %v636 = vunpack.c.h.b16 %v588
        %v637 = vunpack.c.l.b16 %v589
        %v638 = vunpack.c.h.b16 %v589
        %v639 = vunpack.c.l.b16 %v590
        %v640 = vunpack.c.h.b16 %v590
        %v641 = vunpack.c.l.b16 %v591
        %v642 = vunpack.c.h.b16 %v591
        %v643 = vunpack.c.l.b16 %v592
        %v644 = vunpack.c.h.b16 %v592
        %v645 = vunpack.c.l.b16 %v593
        %v646 = vunpack.c.h.b16 %v593
        %v647 = vunpack.c.l.b16 %v594
        %v648 = vunpack.c.h.b16 %v594
        %v649 = vunpack.c.l.b16 %v595
        %v650 = vunpack.c.h.b16 %v595
        %v651 = vunpack.c.l.b16 %v596
        %v652 = vunpack.c.h.b16 %v596
        %v653 = vunpack.c.l.b16 %v597
        %v654 = vunpack.c.h.b16 %v597
        %v655 = vunpack.c.l.b16 %v598
        %v656 = vunpack.c.h.b16 %v598
        %v657 = vunpack.c.l.b16 %v599
        %v658 = vunpack.c.h.b16 %v599
        %v659 = vunpack.c.l.b16 %v600
        %v660 = vunpack.c.h.b16 %v600
        %v661 = vpack.c.b16 %v631, %v629
        %v662 = vpack.c.b16 %v632, %v630
        %v663 = vpack.c.b16 %v635, %v633
        %v664 = vpack.c.b16 %v636, %v634
        %v665 = vpack.c.b16 %v639, %v637
        %v666 = vpack.c.b16 %v640, %v638
        %v667 = vpack.c.b16 %v643, %v641
        %v668 = vpack.c.b16 %v644, %v642
        %v669 = vpack.c.b16 %v647, %v645
        %v670 = vpack.c.b16 %v648, %v646
        %v671 = vpack.c.b16 %v651, %v649
        %v672 = vpack.c.b16 %v652, %v650
        %v673 = vpack.c.b16 %v655, %v653
        %v674 = vpack.c.b16 %v656, %v654
        %v675 = vpack.c.b16 %v659, %v657
        %v676 = vpack.c.b16 %v660, %v658
        %693 = vmatprep.subr.bf16.mxu0 %v676
        %694 = vmatpush1.bf16.msra.mxu0 %v675
        %695 = vmatprep.subr.bf16.mxu0 %v674
        %696 = vmatpush1.bf16.msra.mxu0 %v673
        %697 = vmatprep.subr.bf16.mxu0 %v672
        %698 = vmatpush1.bf16.msra.mxu0 %v671
        %699 = vmatprep.subr.bf16.mxu0 %v670
        %700 = vmatpush1.bf16.msra.mxu0 %v669
        %701 = vmatprep.subr.bf16.mxu0 %v668
        %702 = vmatpush1.bf16.msra.mxu0 %v667
        %703 = vmatprep.subr.bf16.mxu0 %v666
        %704 = vmatpush1.bf16.msra.mxu0 %v665
        %705 = vmatprep.subr.bf16.mxu0 %v664
        %706 = vmatpush1.bf16.msra.mxu0 %v663
        %707 = vmatprep.subr.bf16.mxu0 %v662
        %708 = vmatpush1.bf16.msra.mxu0 %v661
        %709 = vmatprep.subr.bf16.mxu0 0
        %710 = vmatpush2.bf16.msra.mxu0 0
        %711 = vmatprep.subr.bf16.mxu0 0
        %712 = vmatpush2.bf16.msra.mxu0 0
        %713 = vmatprep.subr.bf16.mxu0 0
        %714 = vmatpush2.bf16.msra.mxu0 0
        %715 = vmatprep.subr.bf16.mxu0 0
        %716 = vmatpush2.bf16.msra.mxu0 0
        %717 = vmatprep.subr.bf16.mxu0 0
        %718 = vmatpush2.bf16.msra.mxu0 0
        %719 = vmatprep.subr.bf16.mxu0 0
        %720 = vmatpush2.bf16.msra.mxu0 0
        %721 = vmatprep.subr.bf16.mxu0 0
        %722 = vmatpush2.bf16.msra.mxu0 0
        %723 = vmatprep.subr.bf16.mxu0 0
        %724 = vmatpush2.bf16.msra.mxu0 0
        %725 = vmatprep.mubr.bf16.mxu0 0
        %726 = vmatmul.mubr.bf16.gmra.mxu0 %v584
        %v727 = vpop.f32.mrf.mxu0
        %v728 = vadd.f32 %v606, %v727
        %v729 = vpop.f32.mrf.mxu0
        %v730 = vadd.f32 %v610, %v729
        %v731 = vpop.f32.mrf.mxu0
        %v732 = vpop.f32.mrf.mxu0
        %733 = vdwg.mxu0
        %v734 = vmax.f32 %v728, 0.0
        %v735 = vmax.f32 %v730, 0.0
        %v736 = vpack.c.bf16 %v734, %v734
        %v737 = vpack.c.bf16 %v735, %v735
        %v738 = vld [vmem:[%s481] sm:$0xff]
        %v739 = vld [vmem:[%s481 + $0x8] sm:$0xff]
        %v740 = vld [vmem:[%s481 + $0x10] sm:$0xff]
        %v741 = vld [vmem:[%s481 + $0x18] sm:$0xff]
        %v742 = vld [vmem:[%s481 + $0x20] sm:$0xff]
        %v743 = vld [vmem:[%s481 + $0x28] sm:$0xff]
        %v744 = vld [vmem:[%s481 + $0x30] sm:$0xff]
        %v745 = vld [vmem:[%s481 + $0x38] sm:$0xff]
        %v746 = vld [vmem:[%s481 + $0x40] sm:$0xff]
        %v747 = vld [vmem:[%s481 + $0x48] sm:$0xff]
        %v748 = vld [vmem:[%s481 + $0x50] sm:$0xff]
        %v749 = vld [vmem:[%s481 + $0x58] sm:$0xff]
        %v750 = vld [vmem:[%s481 + $0x60] sm:$0xff]
        %v751 = vld [vmem:[%s481 + $0x68] sm:$0xff]
        %v752 = vld [vmem:[%s481 + $0x70] sm:$0xff]
        %v753 = vld [vmem:[%s481 + $0x78] sm:$0xff]
        %v754 = vld [vmem:[%s481 + $0x80] sm:$0xff]
        %v755 = vld [vmem:[%s481 + $0x88] sm:$0xff]
        %v756 = vld [vmem:[%s481 + $0x90] sm:$0xff]
        %v757 = vld [vmem:[%s481 + $0x98] sm:$0xff]
        %v758 = vld [vmem:[%s481 + $0xa0] sm:$0xff]
        %v759 = vld [vmem:[%s481 + $0xa8] sm:$0xff]
        %v760 = vld [vmem:[%s481 + $0xb0] sm:$0xff]
        %v761 = vld [vmem:[%s481 + $0xb8] sm:$0xff]
        %v762 = vld [vmem:[%s481 + $0xc0] sm:$0xff]
        %v763 = vld [vmem:[%s481 + $0xc8] sm:$0xff]
        %v764 = vld [vmem:[%s481 + $0xd0] sm:$0xff]
        %v765 = vld [vmem:[%s481 + $0xd8] sm:$0xff]
        %v766 = vld [vmem:[%s481 + $0xe0] sm:$0xff]
        %v767 = vld [vmem:[%s481 + $0xe8] sm:$0xff]
        %v768 = vld [vmem:[%s481 + $0xf0] sm:$0xff]
        %v769 = vld [vmem:[%s481 + $0xf8] sm:$0xff]
        %v770 = vld [vmem:[%s578] sm:$0x3]
        %v772 = vlaneseq
        %v773 = vshrl.u32 %v772, 7
        %v774 = vsub.s32 0, %v773
        %v775 = vrot.slane %v770, %v774
        %v776 = vlaneseq
        %v777 = vshrl.u32 %v776, 7
        %v778 = vsub.s32 1, %v777
        %v779 = vrot.slane %v770, %v778
        %v814 = vunpack.c.l.b16 %v738
        %v815 = vunpack.c.h.b16 %v738
        %v816 = vunpack.c.l.b16 %v739
        %v817 = vunpack.c.h.b16 %v739
        %v818 = vunpack.c.l.b16 %v740
        %v819 = vunpack.c.h.b16 %v740
        %v820 = vunpack.c.l.b16 %v741
        %v821 = vunpack.c.h.b16 %v741
        %v822 = vunpack.c.l.b16 %v742
        %v823 = vunpack.c.h.b16 %v742
        %v824 = vunpack.c.l.b16 %v743
        %v825 = vunpack.c.h.b16 %v743
        %v826 = vunpack.c.l.b16 %v744
        %v827 = vunpack.c.h.b16 %v744
        %v828 = vunpack.c.l.b16 %v745
        %v829 = vunpack.c.h.b16 %v745
        %v830 = vunpack.c.l.b16 %v746
        %v831 = vunpack.c.h.b16 %v746
        %v832 = vunpack.c.l.b16 %v747
        %v833 = vunpack.c.h.b16 %v747
        %v834 = vunpack.c.l.b16 %v748
        %v835 = vunpack.c.h.b16 %v748
        %v836 = vunpack.c.l.b16 %v749
        %v837 = vunpack.c.h.b16 %v749
        %v838 = vunpack.c.l.b16 %v750
        %v839 = vunpack.c.h.b16 %v750
        %v840 = vunpack.c.l.b16 %v751
        %v841 = vunpack.c.h.b16 %v751
        %v842 = vunpack.c.l.b16 %v752
        %v843 = vunpack.c.h.b16 %v752
        %v844 = vunpack.c.l.b16 %v753
        %v845 = vunpack.c.h.b16 %v753
        %v846 = vunpack.c.l.b16 %v754
        %v847 = vunpack.c.h.b16 %v754
        %v848 = vunpack.c.l.b16 %v755
        %v849 = vunpack.c.h.b16 %v755
        %v850 = vunpack.c.l.b16 %v756
        %v851 = vunpack.c.h.b16 %v756
        %v852 = vunpack.c.l.b16 %v757
        %v853 = vunpack.c.h.b16 %v757
        %v854 = vunpack.c.l.b16 %v758
        %v855 = vunpack.c.h.b16 %v758
        %v856 = vunpack.c.l.b16 %v759
        %v857 = vunpack.c.h.b16 %v759
        %v858 = vunpack.c.l.b16 %v760
        %v859 = vunpack.c.h.b16 %v760
        %v860 = vunpack.c.l.b16 %v761
        %v861 = vunpack.c.h.b16 %v761
        %v862 = vunpack.c.l.b16 %v762
        %v863 = vunpack.c.h.b16 %v762
        %v864 = vunpack.c.l.b16 %v763
        %v865 = vunpack.c.h.b16 %v763
        %v866 = vunpack.c.l.b16 %v764
        %v867 = vunpack.c.h.b16 %v764
        %v868 = vunpack.c.l.b16 %v765
        %v869 = vunpack.c.h.b16 %v765
        %v870 = vunpack.c.l.b16 %v766
        %v871 = vunpack.c.h.b16 %v766
        %v872 = vunpack.c.l.b16 %v767
        %v873 = vunpack.c.h.b16 %v767
        %v874 = vunpack.c.l.b16 %v768
        %v875 = vunpack.c.h.b16 %v768
        %v876 = vunpack.c.l.b16 %v769
        %v877 = vunpack.c.h.b16 %v769
        %v878 = vpack.c.b16 %v816, %v814
        %v879 = vpack.c.b16 %v817, %v815
        %v880 = vpack.c.b16 %v820, %v818
        %v881 = vpack.c.b16 %v821, %v819
        %v882 = vpack.c.b16 %v824, %v822
        %v883 = vpack.c.b16 %v825, %v823
        %v884 = vpack.c.b16 %v828, %v826
        %v885 = vpack.c.b16 %v829, %v827
        %v886 = vpack.c.b16 %v832, %v830
        %v887 = vpack.c.b16 %v833, %v831
        %v888 = vpack.c.b16 %v836, %v834
        %v889 = vpack.c.b16 %v837, %v835
        %v890 = vpack.c.b16 %v840, %v838
        %v891 = vpack.c.b16 %v841, %v839
        %v892 = vpack.c.b16 %v844, %v842
        %v893 = vpack.c.b16 %v845, %v843
        %v894 = vpack.c.b16 %v848, %v846
        %v895 = vpack.c.b16 %v849, %v847
        %v896 = vpack.c.b16 %v852, %v850
        %v897 = vpack.c.b16 %v853, %v851
        %v898 = vpack.c.b16 %v856, %v854
        %v899 = vpack.c.b16 %v857, %v855
        %v900 = vpack.c.b16 %v860, %v858
        %v901 = vpack.c.b16 %v861, %v859
        %v902 = vpack.c.b16 %v864, %v862
        %v903 = vpack.c.b16 %v865, %v863
        %v904 = vpack.c.b16 %v868, %v866
        %v905 = vpack.c.b16 %v869, %v867
        %v906 = vpack.c.b16 %v872, %v870
        %v907 = vpack.c.b16 %v873, %v871
        %v908 = vpack.c.b16 %v876, %v874
        %v909 = vpack.c.b16 %v877, %v875
        %942 = vmatprep.subr.bf16.mxu0 %v893
        %943 = vmatpush1.bf16.msra.mxu0 %v892
        %944 = vmatprep.subr.bf16.mxu0 %v891
        %945 = vmatpush1.bf16.msra.mxu0 %v890
        %946 = vmatprep.subr.bf16.mxu0 %v889
        %947 = vmatpush1.bf16.msra.mxu0 %v888
        %948 = vmatprep.subr.bf16.mxu0 %v887
        %949 = vmatpush1.bf16.msra.mxu0 %v886
        %950 = vmatprep.subr.bf16.mxu0 %v885
        %951 = vmatpush1.bf16.msra.mxu0 %v884
        %952 = vmatprep.subr.bf16.mxu0 %v883
        %953 = vmatpush1.bf16.msra.mxu0 %v882
        %954 = vmatprep.subr.bf16.mxu0 %v881
        %955 = vmatpush1.bf16.msra.mxu0 %v880
        %956 = vmatprep.subr.bf16.mxu0 %v879
        %957 = vmatpush1.bf16.msra.mxu0 %v878
        %958 = vmatprep.subr.bf16.mxu0 %v909
        %959 = vmatpush2.bf16.msra.mxu0 %v908
        %960 = vmatprep.subr.bf16.mxu0 %v907
        %961 = vmatpush2.bf16.msra.mxu0 %v906
        %962 = vmatprep.subr.bf16.mxu0 %v905
        %963 = vmatpush2.bf16.msra.mxu0 %v904
        %964 = vmatprep.subr.bf16.mxu0 %v903
        %965 = vmatpush2.bf16.msra.mxu0 %v902
        %966 = vmatprep.subr.bf16.mxu0 %v901
        %967 = vmatpush2.bf16.msra.mxu0 %v900
        %968 = vmatprep.subr.bf16.mxu0 %v899
        %969 = vmatpush2.bf16.msra.mxu0 %v898
        %970 = vmatprep.subr.bf16.mxu0 %v897
        %971 = vmatpush2.bf16.msra.mxu0 %v896
        %972 = vmatprep.subr.bf16.mxu0 %v895
        %973 = vmatpush2.bf16.msra.mxu0 %v894
        %974 = vmatprep.mubr.bf16.mxu0 %v737
        %975 = vmatmul.mubr.bf16.gmra.mxu0 %v736
        %v976 = vpop.f32.mrf.mxu0
        %v977 = vadd.f32 %v775, %v976
        %v978 = vpop.f32.mrf.mxu0
        %v979 = vadd.f32 %v779, %v978
        %v980 = vpop.f32.mrf.mxu0
        %v981 = vpop.f32.mrf.mxu0
        %982 = vdwg.mxu0
        %v983 = vmax.f32 %v977, 0.0
        %v984 = vmax.f32 %v979, 0.0
        %v985 = vpack.c.bf16 %v983, %v983
        %v986 = vpack.c.bf16 %v984, %v984
        %v987 = vld [vmem:[%s490] sm:$0xff]
        %v988 = vld [vmem:[%s490 + $0x8] sm:$0xff]
        %v989 = vld [vmem:[%s490 + $0x10] sm:$0xff]
        %v990 = vld [vmem:[%s490 + $0x18] sm:$0xff]
        %v991 = vld [vmem:[%s490 + $0x20] sm:$0xff]
        %v992 = vld [vmem:[%s490 + $0x28] sm:$0xff]
        %v993 = vld [vmem:[%s490 + $0x30] sm:$0xff]
        %v994 = vld [vmem:[%s490 + $0x38] sm:$0xff]
        %v995 = vld [vmem:[%s490 + $0x40] sm:$0xff]
        %v996 = vld [vmem:[%s490 + $0x48] sm:$0xff]
        %v997 = vld [vmem:[%s490 + $0x50] sm:$0xff]
        %v998 = vld [vmem:[%s490 + $0x58] sm:$0xff]
        %v999 = vld [vmem:[%s490 + $0x60] sm:$0xff]
        %v1000 = vld [vmem:[%s490 + $0x68] sm:$0xff]
        %v1001 = vld [vmem:[%s490 + $0x70] sm:$0xff]
        %v1002 = vld [vmem:[%s490 + $0x78] sm:$0xff]
        %v1003 = vld [vmem:[%s490 + $0x80] sm:$0xff]
        %v1004 = vld [vmem:[%s490 + $0x88] sm:$0xff]
        %v1005 = vld [vmem:[%s490 + $0x90] sm:$0xff]
        %v1006 = vld [vmem:[%s490 + $0x98] sm:$0xff]
        %v1007 = vld [vmem:[%s490 + $0xa0] sm:$0xff]
        %v1008 = vld [vmem:[%s490 + $0xa8] sm:$0xff]
        %v1009 = vld [vmem:[%s490 + $0xb0] sm:$0xff]
        %v1010 = vld [vmem:[%s490 + $0xb8] sm:$0xff]
        %v1011 = vld [vmem:[%s490 + $0xc0] sm:$0xff]
        %v1012 = vld [vmem:[%s490 + $0xc8] sm:$0xff]
        %v1013 = vld [vmem:[%s490 + $0xd0] sm:$0xff]
        %v1014 = vld [vmem:[%s490 + $0xd8] sm:$0xff]
        %v1015 = vld [vmem:[%s490 + $0xe0] sm:$0xff]
        %v1016 = vld [vmem:[%s490 + $0xe8] sm:$0xff]
        %v1017 = vld [vmem:[%s490 + $0xf0] sm:$0xff]
        %v1018 = vld [vmem:[%s490 + $0xf8] sm:$0xff]
        %v1019 = vld [vmem:[%s499] sm:$0x3]
        %v1021 = vlaneseq
        %v1022 = vshrl.u32 %v1021, 7
        %v1023 = vsub.s32 0, %v1022
        %v1024 = vrot.slane %v1019, %v1023
        %v1025 = vlaneseq
        %v1026 = vshrl.u32 %v1025, 7
        %v1027 = vsub.s32 1, %v1026
        %v1028 = vrot.slane %v1019, %v1027
        %v1063 = vunpack.c.l.b16 %v987
        %v1064 = vunpack.c.h.b16 %v987
        %v1065 = vunpack.c.l.b16 %v988
        %v1066 = vunpack.c.h.b16 %v988
        %v1067 = vunpack.c.l.b16 %v989
        %v1068 = vunpack.c.h.b16 %v989
        %v1069 = vunpack.c.l.b16 %v990
        %v1070 = vunpack.c.h.b16 %v990
        %v1071 = vunpack.c.l.b16 %v991
        %v1072 = vunpack.c.h.b16 %v991
        %v1073 = vunpack.c.l.b16 %v992
        %v1074 = vunpack.c.h.b16 %v992
        %v1075 = vunpack.c.l.b16 %v993
        %v1076 = vunpack.c.h.b16 %v993
        %v1077 = vunpack.c.l.b16 %v994
        %v1078 = vunpack.c.h.b16 %v994
        %v1079 = vunpack.c.l.b16 %v995
        %v1080 = vunpack.c.h.b16 %v995
        %v1081 = vunpack.c.l.b16 %v996
        %v1082 = vunpack.c.h.b16 %v996
        %v1083 = vunpack.c.l.b16 %v997
        %v1084 = vunpack.c.h.b16 %v997
        %v1085 = vunpack.c.l.b16 %v998
        %v1086 = vunpack.c.h.b16 %v998
        %v1087 = vunpack.c.l.b16 %v999
        %v1088 = vunpack.c.h.b16 %v999
        %v1089 = vunpack.c.l.b16 %v1000
        %v1090 = vunpack.c.h.b16 %v1000
        %v1091 = vunpack.c.l.b16 %v1001
        %v1092 = vunpack.c.h.b16 %v1001
        %v1093 = vunpack.c.l.b16 %v1002
        %v1094 = vunpack.c.h.b16 %v1002
        %v1095 = vunpack.c.l.b16 %v1003
        %v1096 = vunpack.c.h.b16 %v1003
        %v1097 = vunpack.c.l.b16 %v1004
        %v1098 = vunpack.c.h.b16 %v1004
        %v1099 = vunpack.c.l.b16 %v1005
        %v1100 = vunpack.c.h.b16 %v1005
        %v1101 = vunpack.c.l.b16 %v1006
        %v1102 = vunpack.c.h.b16 %v1006
        %v1103 = vunpack.c.l.b16 %v1007
        %v1104 = vunpack.c.h.b16 %v1007
        %v1105 = vunpack.c.l.b16 %v1008
        %v1106 = vunpack.c.h.b16 %v1008
        %v1107 = vunpack.c.l.b16 %v1009
        %v1108 = vunpack.c.h.b16 %v1009
        %v1109 = vunpack.c.l.b16 %v1010
        %v1110 = vunpack.c.h.b16 %v1010
        %v1111 = vunpack.c.l.b16 %v1011
        %v1112 = vunpack.c.h.b16 %v1011
        %v1113 = vunpack.c.l.b16 %v1012
        %v1114 = vunpack.c.h.b16 %v1012
        %v1115 = vunpack.c.l.b16 %v1013
        %v1116 = vunpack.c.h.b16 %v1013
        %v1117 = vunpack.c.l.b16 %v1014
        %v1118 = vunpack.c.h.b16 %v1014
        %v1119 = vunpack.c.l.b16 %v1015
        %v1120 = vunpack.c.h.b16 %v1015
        %v1121 = vunpack.c.l.b16 %v1016
        %v1122 = vunpack.c.h.b16 %v1016
        %v1123 = vunpack.c.l.b16 %v1017
        %v1124 = vunpack.c.h.b16 %v1017
        %v1125 = vunpack.c.l.b16 %v1018
        %v1126 = vunpack.c.h.b16 %v1018
        %v1127 = vpack.c.b16 %v1065, %v1063
        %v1128 = vpack.c.b16 %v1066, %v1064
        %v1129 = vpack.c.b16 %v1069, %v1067
        %v1130 = vpack.c.b16 %v1070, %v1068
        %v1131 = vpack.c.b16 %v1073, %v1071
        %v1132 = vpack.c.b16 %v1074, %v1072
        %v1133 = vpack.c.b16 %v1077, %v1075
        %v1134 = vpack.c.b16 %v1078, %v1076
        %v1135 = vpack.c.b16 %v1081, %v1079
        %v1136 = vpack.c.b16 %v1082, %v1080
        %v1137 = vpack.c.b16 %v1085, %v1083
        %v1138 = vpack.c.b16 %v1086, %v1084
        %v1139 = vpack.c.b16 %v1089, %v1087
        %v1140 = vpack.c.b16 %v1090, %v1088
        %v1141 = vpack.c.b16 %v1093, %v1091
        %v1142 = vpack.c.b16 %v1094, %v1092
        %v1143 = vpack.c.b16 %v1097, %v1095
        %v1144 = vpack.c.b16 %v1098, %v1096
        %v1145 = vpack.c.b16 %v1101, %v1099
        %v1146 = vpack.c.b16 %v1102, %v1100
        %v1147 = vpack.c.b16 %v1105, %v1103
        %v1148 = vpack.c.b16 %v1106, %v1104
        %v1149 = vpack.c.b16 %v1109, %v1107
        %v1150 = vpack.c.b16 %v1110, %v1108
        %v1151 = vpack.c.b16 %v1113, %v1111
        %v1152 = vpack.c.b16 %v1114, %v1112
        %v1153 = vpack.c.b16 %v1117, %v1115
        %v1154 = vpack.c.b16 %v1118, %v1116
        %v1155 = vpack.c.b16 %v1121, %v1119
        %v1156 = vpack.c.b16 %v1122, %v1120
        %v1157 = vpack.c.b16 %v1125, %v1123
        %v1158 = vpack.c.b16 %v1126, %v1124
        %1191 = vmatprep.subr.bf16.mxu0 %v1142
        %1192 = vmatpush1.bf16.msra.mxu0 %v1141
        %1193 = vmatprep.subr.bf16.mxu0 %v1140
        %1194 = vmatpush1.bf16.msra.mxu0 %v1139
        %1195 = vmatprep.subr.bf16.mxu0 %v1138
        %1196 = vmatpush1.bf16.msra.mxu0 %v1137
        %1197 = vmatprep.subr.bf16.mxu0 %v1136
        %1198 = vmatpush1.bf16.msra.mxu0 %v1135
        %1199 = vmatprep.subr.bf16.mxu0 %v1134
        %1200 = vmatpush1.bf16.msra.mxu0 %v1133
        %1201 = vmatprep.subr.bf16.mxu0 %v1132
        %1202 = vmatpush1.bf16.msra.mxu0 %v1131
        %1203 = vmatprep.subr.bf16.mxu0 %v1130
        %1204 = vmatpush1.bf16.msra.mxu0 %v1129
        %1205 = vmatprep.subr.bf16.mxu0 %v1128
        %1206 = vmatpush1.bf16.msra.mxu0 %v1127
        %1207 = vmatprep.subr.bf16.mxu0 %v1158
        %1208 = vmatpush2.bf16.msra.mxu0 %v1157
        %1209 = vmatprep.subr.bf16.mxu0 %v1156
        %1210 = vmatpush2.bf16.msra.mxu0 %v1155
        %1211 = vmatprep.subr.bf16.mxu0 %v1154
        %1212 = vmatpush2.bf16.msra.mxu0 %v1153
        %1213 = vmatprep.subr.bf16.mxu0 %v1152
        %1214 = vmatpush2.bf16.msra.mxu0 %v1151
        %1215 = vmatprep.subr.bf16.mxu0 %v1150
        %1216 = vmatpush2.bf16.msra.mxu0 %v1149
        %1217 = vmatprep.subr.bf16.mxu0 %v1148
        %1218 = vmatpush2.bf16.msra.mxu0 %v1147
        %1219 = vmatprep.subr.bf16.mxu0 %v1146
        %1220 = vmatpush2.bf16.msra.mxu0 %v1145
        %1221 = vmatprep.subr.bf16.mxu0 %v1144
        %1222 = vmatpush2.bf16.msra.mxu0 %v1143
        %1223 = vmatprep.mubr.bf16.mxu0 %v986
        %1224 = vmatmul.mubr.bf16.gmra.mxu0 %v985
        %v1225 = vpop.f32.mrf.mxu0
        %v1226 = vadd.f32 %v1024, %v1225
        %v1227 = vpop.f32.mrf.mxu0
        %v1228 = vadd.f32 %v1028, %v1227
        %v1229 = vpop.f32.mrf.mxu0
        %v1230 = vpop.f32.mrf.mxu0
        %1231 = vdwg.mxu0
        %v1232 = vmax.f32 %v1226, 0.0
        %v1233 = vmax.f32 %v1228, 0.0
        %v1234 = vpack.c.bf16 %v1232, %v1232
        %v1235 = vpack.c.bf16 %v1233, %v1233
        %v1236 = vld [vmem:[%s508] sm:$0xf]
        %v1237 = vld [vmem:[%s508 + $0x4] sm:$0xf]
        %v1238 = vld [vmem:[%s508 + $0x8] sm:$0xf]
        %v1239 = vld [vmem:[%s508 + $0xc] sm:$0xf]
        %v1240 = vld [vmem:[%s508 + $0x10] sm:$0xf]
        %v1241 = vld [vmem:[%s508 + $0x14] sm:$0xf]
        %v1242 = vld [vmem:[%s508 + $0x18] sm:$0xf]
        %v1243 = vld [vmem:[%s508 + $0x1c] sm:$0xf]
        %v1244 = vld [vmem:[%s508 + $0x20] sm:$0xf]
        %v1245 = vld [vmem:[%s508 + $0x24] sm:$0xf]
        %v1246 = vld [vmem:[%s508 + $0x28] sm:$0xf]
        %v1247 = vld [vmem:[%s508 + $0x2c] sm:$0xf]
        %v1248 = vld [vmem:[%s508 + $0x30] sm:$0xf]
        %v1249 = vld [vmem:[%s508 + $0x34] sm:$0xf]
        %v1250 = vld [vmem:[%s508 + $0x38] sm:$0xf]
        %v1251 = vld [vmem:[%s508 + $0x3c] sm:$0xf]
        %v1252 = vld [vmem:[%s508 + $0x40] sm:$0xf]
        %v1253 = vld [vmem:[%s508 + $0x44] sm:$0xf]
        %v1254 = vld [vmem:[%s508 + $0x48] sm:$0xf]
        %v1255 = vld [vmem:[%s508 + $0x4c] sm:$0xf]
        %v1256 = vld [vmem:[%s508 + $0x50] sm:$0xf]
        %v1257 = vld [vmem:[%s508 + $0x54] sm:$0xf]
        %v1258 = vld [vmem:[%s508 + $0x58] sm:$0xf]
        %v1259 = vld [vmem:[%s508 + $0x5c] sm:$0xf]
        %v1260 = vld [vmem:[%s508 + $0x60] sm:$0xf]
        %v1261 = vld [vmem:[%s508 + $0x64] sm:$0xf]
        %v1262 = vld [vmem:[%s508 + $0x68] sm:$0xf]
        %v1263 = vld [vmem:[%s508 + $0x6c] sm:$0xf]
        %v1264 = vld [vmem:[%s508 + $0x70] sm:$0xf]
        %v1265 = vld [vmem:[%s508 + $0x74] sm:$0xf]
        %v1266 = vld [vmem:[%s508 + $0x78] sm:$0xf]
        %v1267 = vld [vmem:[%s508 + $0x7c] sm:$0xf]
        %v1268 = vld [vmem:[%s581] sm:$0x1]
        %v1270 = vlaneseq
        %v1271 = vshrl.u32 %v1270, 7
        %v1272 = vsub.s32 0, %v1271
        %v1273 = vrot.slane %v1268, %v1272
        %v1307 = vunpack.c.l.b16 %v1236
        %v1308 = vunpack.c.l.b16 %v1237
        %v1309 = vunpack.c.l.b16 %v1238
        %v1310 = vunpack.c.l.b16 %v1239
        %v1311 = vunpack.c.l.b16 %v1240
        %v1312 = vunpack.c.l.b16 %v1241
        %v1313 = vunpack.c.l.b16 %v1242
        %v1314 = vunpack.c.l.b16 %v1243
        %v1315 = vunpack.c.l.b16 %v1244
        %v1316 = vunpack.c.l.b16 %v1245
        %v1317 = vunpack.c.l.b16 %v1246
        %v1318 = vunpack.c.l.b16 %v1247
        %v1319 = vunpack.c.l.b16 %v1248
        %v1320 = vunpack.c.l.b16 %v1249
        %v1321 = vunpack.c.l.b16 %v1250
        %v1322 = vunpack.c.l.b16 %v1251
        %v1323 = vunpack.c.l.b16 %v1252
        %v1324 = vunpack.c.l.b16 %v1253
        %v1325 = vunpack.c.l.b16 %v1254
        %v1326 = vunpack.c.l.b16 %v1255
        %v1327 = vunpack.c.l.b16 %v1256
        %v1328 = vunpack.c.l.b16 %v1257
        %v1329 = vunpack.c.l.b16 %v1258
        %v1330 = vunpack.c.l.b16 %v1259
        %v1331 = vunpack.c.l.b16 %v1260
        %v1332 = vunpack.c.l.b16 %v1261
        %v1333 = vunpack.c.l.b16 %v1262
        %v1334 = vunpack.c.l.b16 %v1263
        %v1335 = vunpack.c.l.b16 %v1264
        %v1336 = vunpack.c.l.b16 %v1265
        %v1337 = vunpack.c.l.b16 %v1266
        %v1338 = vunpack.c.l.b16 %v1267
        %v1339 = vpack.c.b16 %v1308, %v1307
        %v1340 = vpack.c.b16 %v1310, %v1309
        %v1341 = vpack.c.b16 %v1312, %v1311
        %v1342 = vpack.c.b16 %v1314, %v1313
        %v1343 = vpack.c.b16 %v1316, %v1315
        %v1344 = vpack.c.b16 %v1318, %v1317
        %v1345 = vpack.c.b16 %v1320, %v1319
        %v1346 = vpack.c.b16 %v1322, %v1321
        %v1347 = vpack.c.b16 %v1324, %v1323
        %v1348 = vpack.c.b16 %v1326, %v1325
        %v1349 = vpack.c.b16 %v1328, %v1327
        %v1350 = vpack.c.b16 %v1330, %v1329
        %v1351 = vpack.c.b16 %v1332, %v1331
        %v1352 = vpack.c.b16 %v1334, %v1333
        %v1353 = vpack.c.b16 %v1336, %v1335
        %v1354 = vpack.c.b16 %v1338, %v1337
        %1371 = vmatprep.subr.bf16.mxu0 0
        %1372 = vmatpush1.bf16.msra.mxu0 %v1346
        %1373 = vmatprep.subr.bf16.mxu0 0
        %1374 = vmatpush1.bf16.msra.mxu0 %v1345
        %1375 = vmatprep.subr.bf16.mxu0 0
        %1376 = vmatpush1.bf16.msra.mxu0 %v1344
        %1377 = vmatprep.subr.bf16.mxu0 0
        %1378 = vmatpush1.bf16.msra.mxu0 %v1343
        %1379 = vmatprep.subr.bf16.mxu0 0
        %1380 = vmatpush1.bf16.msra.mxu0 %v1342
        %1381 = vmatprep.subr.bf16.mxu0 0
        %1382 = vmatpush1.bf16.msra.mxu0 %v1341
        %1383 = vmatprep.subr.bf16.mxu0 0
        %1384 = vmatpush1.bf16.msra.mxu0 %v1340
        %1385 = vmatprep.subr.bf16.mxu0 0
        %1386 = vmatpush1.bf16.msra.mxu0 %v1339
        %1387 = vmatprep.subr.bf16.mxu0 0
        %1388 = vmatpush2.bf16.msra.mxu0 %v1354
        %1389 = vmatprep.subr.bf16.mxu0 0
        %1390 = vmatpush2.bf16.msra.mxu0 %v1353
        %1391 = vmatprep.subr.bf16.mxu0 0
        %1392 = vmatpush2.bf16.msra.mxu0 %v1352
        %1393 = vmatprep.subr.bf16.mxu0 0
        %1394 = vmatpush2.bf16.msra.mxu0 %v1351
        %1395 = vmatprep.subr.bf16.mxu0 0
        %1396 = vmatpush2.bf16.msra.mxu0 %v1350
        %1397 = vmatprep.subr.bf16.mxu0 0
        %1398 = vmatpush2.bf16.msra.mxu0 %v1349
        %1399 = vmatprep.subr.bf16.mxu0 0
        %1400 = vmatpush2.bf16.msra.mxu0 %v1348
        %1401 = vmatprep.subr.bf16.mxu0 0
        %1402 = vmatpush2.bf16.msra.mxu0 %v1347
        %1403 = vmatprep.mubr.bf16.mxu0 %v1235
        %1404 = vmatmul.mubr.bf16.gmra.mxu0 %v1234
        %v1405 = vpop.f32.mrf.mxu0
        %v1406 = vadd.f32 %v1273, %v1405
        %v1407 = vpop.f32.mrf.mxu0
        %v1408 = vpop.f32.mrf.mxu0
        %v1409 = vpop.f32.mrf.mxu0
        %1410 = vdwg.mxu0
        %1411 = vst [vmem:[%s574] sm:$0xff] %v1406
        %s1412 = sand.u32 %s270, 1
        %s1413 = scalar_lea.sflag [#allocation4], %s1412
        %s1414 = sand.u32 %s270, 1
        %s1415 = smul.addr %s1414, 8
        %s1416 = scalar_lea.vmem [#allocation14], %s1415
        // Predicated region
        $region85: #{tpu_custom_call.1} parent=55 // pred_check
          %p1417 = pneg %p280
        $region86: #{tpu_custom_call.1} parent=55 // pred_check_branch
          %1419 = sbr.rel (%p1417) target = $region88
        $region87: #{tpu_custom_call.1} parent=55 // pred_region
          %s1421 = ssub.s32 128, 128
          %1422 = vsyncadd %s1413, %s1421
          %s1423 = smul.addr %s33, 128
          %s1424 = scalar_lea.hbm %s9, %s1423
          %s1426 = sshll.u32 %s1416, 4
          %s1427 = int_to_ptr.vmem [resolvable:$true] %s1426
          %1429 = dma.vmem_to_hbm [thread:$0]  %s1427, 128, %s1424, %s1413
        $region88: #{tpu_custom_call.1} parent=55 // pred_fallthru
          _
      $region56: #{tpu_custom_call.1} parent=5 // pred_fallthru
        _
      %p1430 = scmp.le.s32.totalorder 2, %s28
      // Predicated region
      $region89: #{tpu_custom_call.1} parent=5 // pred_check
        %p1431 = pneg %p1430
      $region90: #{tpu_custom_call.1} parent=5 // pred_check_branch
        %1433 = sbr.rel (%p1431) target = $region92
      $region91: #{tpu_custom_call.1} parent=5 // pred_region
        %s1434 = ssub.s32 %s28, 2
        // Predicated region
        $region93: #{tpu_custom_call.1} parent=91 // pred_check
          %p1435 = pneg %p286
        $region94: #{tpu_custom_call.1} parent=91 // pred_check_branch
          %1437 = sbr.rel (%p1435) target = $region96
        $region95: #{tpu_custom_call.1} parent=91 // pred_region
          %s1438 = sand.u32 %s271, 1
          %s1439 = scalar_lea.sflag [#allocation4], %s1438
          %s1440 = sand.u32 %s271, 1
          %s1441 = smul.addr %s1440, 8
          %s1442 = scalar_lea.vmem [#allocation14], %s1441
          %1443 = dma.done %s1439, 128
        $region96: #{tpu_custom_call.1} parent=91 // pred_fallthru
          _
      $region92: #{tpu_custom_call.1} parent=5 // pred_fallthru
        _
    $region6: #{tpu_custom_call.1} parent=1 // loop_footer
      %s32 = sadd.s32 1, %s28
    $region7: #{tpu_custom_call.1} parent=1 // loop_footer_branch
      %27 = sbr.rel target = $region3
    $region8: #{tpu_custom_call.1} parent=1 // loop_exit
      _
    %1444 = vsyncpa [#allocation3], 1
    %s1445 = scalar_lea.sflag [#allocation3], 1
    %1446 = vsyncpa %s1445, 1
    %1447 = vsyncpa [#allocation6], 1
    %s1448 = scalar_lea.sflag [#allocation6], 1
    %1449 = vsyncpa %s1448, 1
    %1450 = vsyncpa [#allocation9], 1
    %s1451 = scalar_lea.sflag [#allocation9], 1
    %1452 = vsyncpa %s1451, 1
    %1453 = vsyncpa [#allocation12], 1
    %s1454 = scalar_lea.sflag [#allocation12], 1
    %1455 = vsyncpa %s1454, 1
    %1456 = vsyncpa [#allocation4], 1
    %s1457 = scalar_lea.sflag [#allocation4], 1
    %1458 = vsyncpa %s1457, 1

</llo_original>
